<compile_context>
chip_gen: v5e
topology: v5e:2x2
jax: 0.10.0
libtpu: 0.0.40
codegen_flags: <defaults>
</compile_context>

<pallas_src>
import functools

import jax
import jax.numpy as jnp
from jax import lax
from jax.experimental import pallas as pl
from jax.experimental.pallas import tpu as pltpu


# VMEM stats-accumulator slots
_A00, _A01, _A11, _B0, _B1 = range(5)


def _depth_loss_kernel(pred_ref, targ_ref, out_ref,
                       stats_acc, l1_acc, ss_ref,
                       *, inv_cap, n_pix, needs_mask):
    """Grid = (batch, phase, tile).

    phase 0: accumulate the 2x2 normal-equation sums into (8,128) VMEM vectors.
    phase 1: solve scale/shift once (tile 0), align prediction, cap disparity,
             invert to depth, accumulate |depth - target| into an (8,128) VMEM
             vector; emit the raw accumulator at the last tile.
    """
    phase = pl.program_id(1)
    t = pl.program_id(2)
    n_tiles = pl.num_programs(2)

    tr = pred_ref.shape[1]          # tile rows (multiple of 8)
    ng = tr // 8                    # number of (8,128) vreg groups per tile

    def vsum(x):
        # (tr,128) -> (ng,8,128) splits exactly on vreg tiles; summing the
        # leading axis is pure elementwise VALU work (no XLU per tile).
        return jnp.sum(x.reshape(ng, 8, 128), axis=0)

    @pl.when(phase == 0)
    def _phase_stats():
        @pl.when(t == 0)
        def _init():
            stats_acc[...] = jnp.zeros_like(stats_acc)

        pred = pred_ref[0]          # (tr, 128) float32
        targ = targ_ref[0]          # (tr, 128) float32
        valid = targ > 0.0
        mask = valid.astype(jnp.float32)
        # target disparity with mask folded in (padded/invalid targ==0 -> 0)
        tdisp = mask / jnp.where(valid, targ, 1.0)
        mp = jnp.where(valid, pred, 0.0)          # mask * pred
        stats_acc[_A00] += vsum(mp * pred)        # sum(mask * pred^2)
        stats_acc[_A01] += vsum(mp)               # sum(mask * pred)
        stats_acc[_A11] += vsum(mask)             # sum(mask)
        stats_acc[_B0] += vsum(mp * tdisp)        # sum(mask * pred * tdisp)
        stats_acc[_B1] += vsum(tdisp)             # sum(mask * tdisp)

    @pl.when(phase == 1)
    def _phase_loss():
        @pl.when(t == 0)
        def _solve():
            # single end-of-image cross-lane reduction + 2x2 solve
            a00 = jnp.sum(stats_acc[_A00])
            a01 = jnp.sum(stats_acc[_A01])
            a11 = jnp.sum(stats_acc[_A11])
            b0 = jnp.sum(stats_acc[_B0])
            b1 = jnp.sum(stats_acc[_B1])
            det = a00 * a11 - a01 * a01
            ok = det != 0.0
            sd = jnp.where(ok, det, jnp.float32(1.0))
            ss_ref[0] = jnp.where(ok, (a11 * b0 - a01 * b1) / sd, 0.0)  # scale
            ss_ref[1] = jnp.where(ok, (a00 * b1 - a01 * b0) / sd, 0.0)  # shift
            l1_acc[...] = jnp.zeros_like(l1_acc)

        scale = ss_ref[0]
        shift = ss_ref[1]
        pred = pred_ref[0]
        targ = targ_ref[0]
        aligned = jnp.maximum(scale * pred + shift, jnp.float32(inv_cap))
        depth = 1.0 / aligned
        err = jnp.abs(depth - targ)
        if needs_mask:
            # mask the padded tail (only compiled in when padding exists)
            row = lax.broadcasted_iota(jnp.int32, (tr, 128), 0)
            lane = lax.broadcasted_iota(jnp.int32, (tr, 128), 1)
            flat = (t * tr + row) * 128 + lane
            err = jnp.where(flat < n_pix, err, 0.0)
        l1_acc[...] += vsum(err)

        @pl.when(t == n_tiles - 1)
        def _emit():
            out_ref[0] = l1_acc[...]    # lane-dense (8,128) unmasked store


def _round_up(x, m):
    return (x + m - 1) // m * m


def compute_depth_then_criterion(prediction, target, depth_cap):
    """prediction, target: (B, H, W) float32 disparity / depth maps.
    Returns scalar float32 L1 loss in depth space."""
    B, H, W = prediction.shape
    P = H * W

    # Chip-aware block sizing.
    try:
        vmem_cap = int(pltpu.get_tpu_info().vmem_capacity_bytes)
    except Exception:
        vmem_cap = 64 * 2 ** 20  # conservative fallback (v7x class)
    if vmem_cap >= 100 * 2 ** 20:     # v5e / v6e class (128 MiB VMEM)
        max_rows = 8192               # 4 MiB f32 per input block
        vmem_ceiling = 96 * 2 ** 20
    else:                             # v7x class (64 MiB VMEM)
        max_rows = 4096               # 2 MiB f32 per input block
        vmem_ceiling = 44 * 2 ** 20

    # Lane-dense (R, 128) layout; R padded to a multiple of the tile rows so
    # every block satisfies the (8,128) constraint and no degenerate fallback
    # (whole-image oversized block / single-sublane layout) can occur.
    r_need = -(-P // 128)
    tr = min(max_rows, _round_up(r_need, 8))
    R = _round_up(r_need, tr)
    n_tiles = R // tr
    P_pad = R * 128
    needs_mask = P_pad != P

    pred_flat = prediction.reshape(B, P)
    targ_flat = target.reshape(B, P)
    if needs_mask:
        pad = P_pad - P
        # zero padding: phase 0 is self-masking (target==0), phase 1 masks it
        pred_flat = jnp.pad(pred_flat, ((0, 0), (0, pad)))
        targ_flat = jnp.pad(targ_flat, ((0, 0), (0, pad)))
    pred3 = pred_flat.reshape(B, R, 128)
    targ3 = targ_flat.reshape(B, R, 128)

    block_bytes = tr * 128 * 4
    # 2 inputs x 2 pipeline buffers + headroom for elementwise temporaries
    vmem_limit = int(min(vmem_ceiling,
                         max(32 * 2 ** 20, 12 * block_bytes + 4 * 2 ** 20)))

    kernel = functools.partial(
        _depth_loss_kernel,
        inv_cap=1.0 / float(depth_cap),
        n_pix=P,
        needs_mask=needs_mask,
    )

    per_image = pl.pallas_call(
        kernel,
        out_shape=jax.ShapeDtypeStruct((B, 8, 128), jnp.float32),
        grid_spec=pltpu.PrefetchScalarGridSpec(
            num_scalar_prefetch=0,
            grid=(B, 2, n_tiles),  # (batch, phase, spatial tile)
            in_specs=[
                pl.BlockSpec((1, tr, 128), lambda b, p, t: (b, t, 0)),
                pl.BlockSpec((1, tr, 128), lambda b, p, t: (b, t, 0)),
            ],
            out_specs=pl.BlockSpec((1, 8, 128), lambda b, p, t: (b, 0, 0)),
            scratch_shapes=[
                pltpu.VMEM((5, 8, 128), jnp.float32),   # normal-equation sums
                pltpu.VMEM((8, 128), jnp.float32),      # L1 accumulator
                pltpu.SMEM((2,), jnp.float32),          # scale, shift
            ],
        ),
        compiler_params=pltpu.CompilerParams(
            dimension_semantics=("parallel", "arbitrary", "arbitrary"),
            vmem_limit_bytes=vmem_limit,
        ),
    )(pred3, targ3)

    # Per-image L1 partial vectors -> global mean over all B*H*W elements.
    return jnp.sum(per_image) / jnp.float32(B * P)


def _reference(prediction, target, depth_cap):
    """Pure-JAX reference mirroring the PyTorch module semantics."""
    valid = target > 0.0
    mask = valid.astype(jnp.float32)
    tdisp = jnp.where(valid, 1.0 / jnp.where(valid, target, 1.0), 0.0)
    a00 = jnp.sum(mask * prediction * prediction, axis=(1, 2))
    a01 = jnp.sum(mask * prediction, axis=(1, 2))
    a11 = jnp.sum(mask, axis=(1, 2))
    b0 = jnp.sum(mask * prediction * tdisp, axis=(1, 2))
    b1 = jnp.sum(mask * tdisp, axis=(1, 2))
    det = a00 * a11 - a01 * a01
    ok = det != 0.0
    sd = jnp.where(ok, det, 1.0)
    scale = jnp.where(ok, (a11 * b0 - a01 * b1) / sd, 0.0)
    shift = jnp.where(ok, (-a01 * b0 + a00 * b1) / sd, 0.0)
    aligned = scale[:, None, None] * prediction + shift[:, None, None]
    aligned = jnp.maximum(aligned, 1.0 / depth_cap)
    depth = 1.0 / aligned
    return jnp.mean(jnp.abs(depth - target))


if __name__ == "__main__":
    B, H, W = 2, 16, 16
    depth_cap = 10.0

    key = jax.random.PRNGKey(0)
    k1, k2, k3 = jax.random.split(key, 3)
    # prediction: positive-ish disparity map
    prediction = jax.random.uniform(k1, (B, H, W), jnp.float32, 0.05, 1.0)
    # target: depth map with some invalid (zero) pixels
    depth_map = jax.random.uniform(k2, (B, H, W), jnp.float32, 1.0, depth_cap)
    holes = jax.random.uniform(k3, (B, H, W)) < 0.1
    target = jnp.where(holes, 0.0, depth_map)

    loss = compute_depth_then_criterion(prediction, target, depth_cap)
    loss = jax.block_until_ready(loss)

    ref = _reference(prediction, target, depth_cap)
    assert jnp.allclose(loss, ref, rtol=1e-5, atol=1e-5), (float(loss), float(ref))

    print("KERNEL_OK")
</pallas_src>

<mosaic_0001>
module attributes {stable_mosaic.version = 11 : i64} {
  func.func @_depth_loss_kernel(%arg0: i32, %arg1: i32, %arg2: i32, %arg3: memref<1x8x128xf32, #tpu.memory_space<vmem>>, %arg4: memref<1x8x128xf32, #tpu.memory_space<vmem>>, %arg5: memref<1x8x128xf32, #tpu.memory_space<vmem>>, %arg6: memref<5x8x128xf32, #tpu.memory_space<vmem>>, %arg7: memref<8x128xf32, #tpu.memory_space<vmem>>, %arg8: memref<2xf32, #tpu.memory_space<smem>>) attributes {dimension_semantics = [#tpu.dimension_semantics<parallel>, #tpu.dimension_semantics<arbitrary>, #tpu.dimension_semantics<arbitrary>], iteration_bounds = array<i64: 2, 2, 1>, scalar_prefetch = 0 : i64, scratch_operands = 3 : i64, tpu.core_type = #tpu.core_type<tc>, window_params = [{transform_indices = @transform_0, window_bounds = array<i64: 1, 8, 128>}, {transform_indices = @transform_1, window_bounds = array<i64: 1, 8, 128>}, {transform_indices = @transform_2, window_bounds = array<i64: 1, 8, 128>}]} {
    %c0_i32 = arith.constant 0 : i32
    %0 = arith.cmpi eq, %arg1, %c0_i32 : i32
    %1 = arith.extui %0 : i1 to i32
    %c0_i32_0 = arith.constant 0 : i32
    %2 = arith.cmpi ne, %1, %c0_i32_0 : i32
    scf.if %2 {
      %c0_i32_2 = arith.constant 0 : i32
      %6 = arith.cmpi eq, %arg2, %c0_i32_2 : i32
      %7 = arith.extui %6 : i1 to i32
      %c0_i32_3 = arith.constant 0 : i32
      %8 = arith.cmpi ne, %7, %c0_i32_3 : i32
      scf.if %8 {
        %cst_42 = arith.constant 0.000000e+00 : f32
        %64 = vector.broadcast %cst_42 : f32 to vector<5x8x128xf32>
        %c0_43 = arith.constant 0 : index
        %c0_44 = arith.constant 0 : index
        %c0_45 = arith.constant 0 : index
        %65 = vector.load %arg6[%c0_43, %c0_44, %c0_45] : memref<5x8x128xf32, #tpu.memory_space<vmem>>, vector<5x8x128xf32>
        tpu.vector_store %arg6[%c0_43, %c0_44, %c0_45], %64 {strides = array<i32>} : memref<5x8x128xf32, #tpu.memory_space<vmem>>, vector<5x8x128xf32>,
      } else {
      }
      %c0 = arith.constant 0 : index
      %c0_4 = arith.constant 0 : index
      %c0_5 = arith.constant 0 : index
      %9 = vector.load %arg3[%c0, %c0_4, %c0_5] : memref<1x8x128xf32, #tpu.memory_space<vmem>>, vector<1x8x128xf32>
      %10 = vector.shape_cast %9 : vector<1x8x128xf32> to vector<8x128xf32>
      %c0_6 = arith.constant 0 : index
      %c0_7 = arith.constant 0 : index
      %c0_8 = arith.constant 0 : index
      %11 = vector.load %arg4[%c0_6, %c0_7, %c0_8] : memref<1x8x128xf32, #tpu.memory_space<vmem>>, vector<1x8x128xf32>
      %12 = vector.shape_cast %11 : vector<1x8x128xf32> to vector<8x128xf32>
      %cst = arith.constant 0.000000e+00 : f32
      %13 = vector.broadcast %cst : f32 to vector<8x128xf32>
      %14 = arith.cmpf ogt, %12, %13 : vector<8x128xf32>
      %15 = arith.extui %14 : vector<8x128xi1> to vector<8x128xi32>
      %16 = arith.sitofp %15 : vector<8x128xi32> to vector<8x128xf32>
      %cst_9 = arith.constant 1.000000e+00 : f32
      %17 = vector.broadcast %cst_9 : f32 to vector<8x128xf32>
      %18 = arith.select %14, %12, %17 : vector<8x128xi1>, vector<8x128xf32>
      %19 = arith.divf %16, %18 : vector<8x128xf32>
      %cst_10 = arith.constant 0.000000e+00 : f32
      %20 = vector.broadcast %cst_10 : f32 to vector<8x128xf32>
      %21 = arith.select %14, %10, %20 : vector<8x128xi1>, vector<8x128xf32>
      %c0_11 = arith.constant 0 : index
      %c0_12 = arith.constant 0 : index
      %c0_13 = arith.constant 0 : index
      %22 = vector.load %arg6[%c0_11, %c0_12, %c0_13] : memref<5x8x128xf32, #tpu.memory_space<vmem>>, vector<1x8x128xf32>
      %23 = vector.shape_cast %22 : vector<1x8x128xf32> to vector<8x128xf32>
      %24 = arith.mulf %21, %10 : vector<8x128xf32>
      %25 = vector.shape_cast %24 : vector<8x128xf32> to vector<1x8x128xf32>
      %cst_14 = arith.constant dense<0.000000e+00> : vector<8x128xf32>
      %26 = vector.multi_reduction <add>, %25, %cst_14 [0] : vector<1x8x128xf32> to vector<8x128xf32>
      %27 = arith.addf %23, %26 : vector<8x128xf32>
      %c0_15 = arith.constant 0 : index
      %c0_16 = arith.constant 0 : index
      %c0_17 = arith.constant 0 : index
      %28 = vector.load %arg6[%c0_15, %c0_16, %c0_17] : memref<5x8x128xf32, #tpu.memory_space<vmem>>, vector<1x8x128xf32>
      %29 = vector.shape_cast %28 : vector<1x8x128xf32> to vector<8x128xf32>
      %30 = vector.shape_cast %27 : vector<8x128xf32> to vector<1x8x128xf32>
      tpu.vector_store %arg6[%c0_15, %c0_16, %c0_17], %30 {strides = array<i32>} : memref<5x8x128xf32, #tpu.memory_space<vmem>>, vector<1x8x128xf32>,
      %c1 = arith.constant 1 : index
      %c0_18 = arith.constant 0 : index
      %c0_19 = arith.constant 0 : index
      %31 = vector.load %arg6[%c1, %c0_18, %c0_19] : memref<5x8x128xf32, #tpu.memory_space<vmem>>, vector<1x8x128xf32>
      %32 = vector.shape_cast %31 : vector<1x8x128xf32> to vector<8x128xf32>
      %33 = vector.shape_cast %21 : vector<8x128xf32> to vector<1x8x128xf32>
      %cst_20 = arith.constant dense<0.000000e+00> : vector<8x128xf32>
      %34 = vector.multi_reduction <add>, %33, %cst_20 [0] : vector<1x8x128xf32> to vector<8x128xf32>
      %35 = arith.addf %32, %34 : vector<8x128xf32>
      %c1_21 = arith.constant 1 : index
      %c0_22 = arith.constant 0 : index
      %c0_23 = arith.constant 0 : index
      %36 = vector.load %arg6[%c1_21, %c0_22, %c0_23] : memref<5x8x128xf32, #tpu.memory_space<vmem>>, vector<1x8x128xf32>
      %37 = vector.shape_cast %36 : vector<1x8x128xf32> to vector<8x128xf32>
      %38 = vector.shape_cast %35 : vector<8x128xf32> to vector<1x8x128xf32>
      tpu.vector_store %arg6[%c1_21, %c0_22, %c0_23], %38 {strides = array<i32>} : memref<5x8x128xf32, #tpu.memory_space<vmem>>, vector<1x8x128xf32>,
      %c2 = arith.constant 2 : index
      %c0_24 = arith.constant 0 : index
      %c0_25 = arith.constant 0 : index
      %39 = vector.load %arg6[%c2, %c0_24, %c0_25] : memref<5x8x128xf32, #tpu.memory_space<vmem>>, vector<1x8x128xf32>
      %40 = vector.shape_cast %39 : vector<1x8x128xf32> to vector<8x128xf32>
      %41 = vector.shape_cast %16 : vector<8x128xf32> to vector<1x8x128xf32>
      %cst_26 = arith.constant dense<0.000000e+00> : vector<8x128xf32>
      %42 = vector.multi_reduction <add>, %41, %cst_26 [0] : vector<1x8x128xf32> to vector<8x128xf32>
      %43 = arith.addf %40, %42 : vector<8x128xf32>
      %c2_27 = arith.constant 2 : index
      %c0_28 = arith.constant 0 : index
      %c0_29 = arith.constant 0 : index
      %44 = vector.load %arg6[%c2_27, %c0_28, %c0_29] : memref<5x8x128xf32, #tpu.memory_space<vmem>>, vector<1x8x128xf32>
      %45 = vector.shape_cast %44 : vector<1x8x128xf32> to vector<8x128xf32>
      %46 = vector.shape_cast %43 : vector<8x128xf32> to vector<1x8x128xf32>
      tpu.vector_store %arg6[%c2_27, %c0_28, %c0_29], %46 {strides = array<i32>} : memref<5x8x128xf32, #tpu.memory_space<vmem>>, vector<1x8x128xf32>,
      %c3 = arith.constant 3 : index
      %c0_30 = arith.constant 0 : index
      %c0_31 = arith.constant 0 : index
      %47 = vector.load %arg6[%c3, %c0_30, %c0_31] : memref<5x8x128xf32, #tpu.memory_space<vmem>>, vector<1x8x128xf32>
      %48 = vector.shape_cast %47 : vector<1x8x128xf32> to vector<8x128xf32>
      %49 = arith.mulf %21, %19 : vector<8x128xf32>
      %50 = vector.shape_cast %49 : vector<8x128xf32> to vector<1x8x128xf32>
      %cst_32 = arith.constant dense<0.000000e+00> : vector<8x128xf32>
      %51 = vector.multi_reduction <add>, %50, %cst_32 [0] : vector<1x8x128xf32> to vector<8x128xf32>
      %52 = arith.addf %48, %51 : vector<8x128xf32>
      %c3_33 = arith.constant 3 : index
      %c0_34 = arith.constant 0 : index
      %c0_35 = arith.constant 0 : index
      %53 = vector.load %arg6[%c3_33, %c0_34, %c0_35] : memref<5x8x128xf32, #tpu.memory_space<vmem>>, vector<1x8x128xf32>
      %54 = vector.shape_cast %53 : vector<1x8x128xf32> to vector<8x128xf32>
      %55 = vector.shape_cast %52 : vector<8x128xf32> to vector<1x8x128xf32>
      tpu.vector_store %arg6[%c3_33, %c0_34, %c0_35], %55 {strides = array<i32>} : memref<5x8x128xf32, #tpu.memory_space<vmem>>, vector<1x8x128xf32>,
      %c4 = arith.constant 4 : index
      %c0_36 = arith.constant 0 : index
      %c0_37 = arith.constant 0 : index
      %56 = vector.load %arg6[%c4, %c0_36, %c0_37] : memref<5x8x128xf32, #tpu.memory_space<vmem>>, vector<1x8x128xf32>
      %57 = vector.shape_cast %56 : vector<1x8x128xf32> to vector<8x128xf32>
      %58 = vector.shape_cast %19 : vector<8x128xf32> to vector<1x8x128xf32>
      %cst_38 = arith.constant dense<0.000000e+00> : vector<8x128xf32>
      %59 = vector.multi_reduction <add>, %58, %cst_38 [0] : vector<1x8x128xf32> to vector<8x128xf32>
      %60 = arith.addf %57, %59 : vector<8x128xf32>
      %c4_39 = arith.constant 4 : index
      %c0_40 = arith.constant 0 : index
      %c0_41 = arith.constant 0 : index
      %61 = vector.load %arg6[%c4_39, %c0_40, %c0_41] : memref<5x8x128xf32, #tpu.memory_space<vmem>>, vector<1x8x128xf32>
      %62 = vector.shape_cast %61 : vector<1x8x128xf32> to vector<8x128xf32>
      %63 = vector.shape_cast %60 : vector<8x128xf32> to vector<1x8x128xf32>
      tpu.vector_store %arg6[%c4_39, %c0_40, %c0_41], %63 {strides = array<i32>} : memref<5x8x128xf32, #tpu.memory_space<vmem>>, vector<1x8x128xf32>,
    } else {
    }
    %c1_i32 = arith.constant 1 : i32
    %3 = arith.cmpi eq, %arg1, %c1_i32 : i32
    %4 = arith.extui %3 : i1 to i32
    %c0_i32_1 = arith.constant 0 : i32
    %5 = arith.cmpi ne, %4, %c0_i32_1 : i32
    scf.if %5 {
      %c0_i32_2 = arith.constant 0 : i32
      %6 = arith.cmpi eq, %arg2, %c0_i32_2 : i32
      %7 = arith.extui %6 : i1 to i32
      %c0_i32_3 = arith.constant 0 : i32
      %8 = arith.cmpi ne, %7, %c0_i32_3 : i32
      scf.if %8 {
        %c0_19 = arith.constant 0 : index
        %c0_20 = arith.constant 0 : index
        %c0_21 = arith.constant 0 : index
        %45 = vector.load %arg6[%c0_19, %c0_20, %c0_21] : memref<5x8x128xf32, #tpu.memory_space<vmem>>, vector<1x8x128xf32>
        %46 = vector.shape_cast %45 : vector<1x8x128xf32> to vector<8x128xf32>
        %47 = vector.shape_cast %46 : vector<8x128xf32> to vector<1x8x128xf32>
        %cst_22 = arith.constant dense<0.000000e+00> : vector<1xf32>
        %48 = vector.multi_reduction <add>, %47, %cst_22 [1, 2] : vector<1x8x128xf32> to vector<1xf32>
        %49 = vector.shape_cast %48 : vector<1xf32> to vector<1x1x1xf32>
        %50 = vector.extract %49[0, 0, 0] : f32 from vector<1x1x1xf32>
        %c1_23 = arith.constant 1 : index
        %c0_24 = arith.constant 0 : index
        %c0_25 = arith.constant 0 : index
        %51 = vector.load %arg6[%c1_23, %c0_24, %c0_25] : memref<5x8x128xf32, #tpu.memory_space<vmem>>, vector<1x8x128xf32>
        %52 = vector.shape_cast %51 : vector<1x8x128xf32> to vector<8x128xf32>
        %53 = vector.shape_cast %52 : vector<8x128xf32> to vector<1x8x128xf32>
        %cst_26 = arith.constant dense<0.000000e+00> : vector<1xf32>
        %54 = vector.multi_reduction <add>, %53, %cst_26 [1, 2] : vector<1x8x128xf32> to vector<1xf32>
        %55 = vector.shape_cast %54 : vector<1xf32> to vector<1x1x1xf32>
        %56 = vector.extract %55[0, 0, 0] : f32 from vector<1x1x1xf32>
        %c2 = arith.constant 2 : index
        %c0_27 = arith.constant 0 : index
        %c0_28 = arith.constant 0 : index
        %57 = vector.load %arg6[%c2, %c0_27, %c0_28] : memref<5x8x128xf32, #tpu.memory_space<vmem>>, vector<1x8x128xf32>
        %58 = vector.shape_cast %57 : vector<1x8x128xf32> to vector<8x128xf32>
        %59 = vector.shape_cast %58 : vector<8x128xf32> to vector<1x8x128xf32>
        %cst_29 = arith.constant dense<0.000000e+00> : vector<1xf32>
        %60 = vector.multi_reduction <add>, %59, %cst_29 [1, 2] : vector<1x8x128xf32> to vector<1xf32>
        %61 = vector.shape_cast %60 : vector<1xf32> to vector<1x1x1xf32>
        %62 = vector.extract %61[0, 0, 0] : f32 from vector<1x1x1xf32>
        %c3 = arith.constant 3 : index
        %c0_30 = arith.constant 0 : index
        %c0_31 = arith.constant 0 : index
        %63 = vector.load %arg6[%c3, %c0_30, %c0_31] : memref<5x8x128xf32, #tpu.memory_space<vmem>>, vector<1x8x128xf32>
        %64 = vector.shape_cast %63 : vector<1x8x128xf32> to vector<8x128xf32>
        %65 = vector.shape_cast %64 : vector<8x128xf32> to vector<1x8x128xf32>
        %cst_32 = arith.constant dense<0.000000e+00> : vector<1xf32>
        %66 = vector.multi_reduction <add>, %65, %cst_32 [1, 2] : vector<1x8x128xf32> to vector<1xf32>
        %67 = vector.shape_cast %66 : vector<1xf32> to vector<1x1x1xf32>
        %68 = vector.extract %67[0, 0, 0] : f32 from vector<1x1x1xf32>
        %c4 = arith.constant 4 : index
        %c0_33 = arith.constant 0 : index
        %c0_34 = arith.constant 0 : index
        %69 = vector.load %arg6[%c4, %c0_33, %c0_34] : memref<5x8x128xf32, #tpu.memory_space<vmem>>, vector<1x8x128xf32>
        %70 = vector.shape_cast %69 : vector<1x8x128xf32> to vector<8x128xf32>
        %71 = vector.shape_cast %70 : vector<8x128xf32> to vector<1x8x128xf32>
        %cst_35 = arith.constant dense<0.000000e+00> : vector<1xf32>
        %72 = vector.multi_reduction <add>, %71, %cst_35 [1, 2] : vector<1x8x128xf32> to vector<1xf32>
        %73 = vector.shape_cast %72 : vector<1xf32> to vector<1x1x1xf32>
        %74 = vector.extract %73[0, 0, 0] : f32 from vector<1x1x1xf32>
        %75 = arith.mulf %50, %62 : f32
        %76 = arith.mulf %56, %56 : f32
        %77 = arith.subf %75, %76 : f32
        %cst_36 = arith.constant 0.000000e+00 : f32
        %78 = arith.cmpf one, %77, %cst_36 : f32
        %cst_37 = arith.constant 1.000000e+00 : f32
        %79 = arith.select %78, %77, %cst_37 : f32
        %80 = arith.mulf %62, %68 : f32
        %81 = arith.mulf %56, %74 : f32
        %82 = arith.subf %80, %81 : f32
        %83 = arith.divf %82, %79 : f32
        %cst_38 = arith.constant 0.000000e+00 : f32
        %84 = arith.select %78, %83, %cst_38 : f32
        %c0_39 = arith.constant 0 : index
        %85 = memref.load %arg8[%c0_39] : memref<2xf32, #tpu.memory_space<smem>>
        memref.store %84, %arg8[%c0_39] : memref<2xf32, #tpu.memory_space<smem>>
        %86 = arith.mulf %50, %74 : f32
        %87 = arith.mulf %56, %68 : f32
        %88 = arith.subf %86, %87 : f32
        %89 = arith.divf %88, %79 : f32
        %cst_40 = arith.constant 0.000000e+00 : f32
        %90 = arith.select %78, %89, %cst_40 : f32
        %c1_41 = arith.constant 1 : index
        %91 = memref.load %arg8[%c1_41] : memref<2xf32, #tpu.memory_space<smem>>
        memref.store %90, %arg8[%c1_41] : memref<2xf32, #tpu.memory_space<smem>>
        %cst_42 = arith.constant 0.000000e+00 : f32
        %92 = vector.broadcast %cst_42 : f32 to vector<8x128xf32>
        %c0_43 = arith.constant 0 : index
        %c0_44 = arith.constant 0 : index
        %93 = vector.load %arg7[%c0_43, %c0_44] : memref<8x128xf32, #tpu.memory_space<vmem>>, vector<8x128xf32>
        tpu.vector_store %arg7[%c0_43, %c0_44], %92 {strides = array<i32>} : memref<8x128xf32, #tpu.memory_space<vmem>>, vector<8x128xf32>,
      } else {
      }
      %c0 = arith.constant 0 : index
      %9 = memref.load %arg8[%c0] : memref<2xf32, #tpu.memory_space<smem>>
      %c1 = arith.constant 1 : index
      %10 = memref.load %arg8[%c1] : memref<2xf32, #tpu.memory_space<smem>>
      %c0_4 = arith.constant 0 : index
      %c0_5 = arith.constant 0 : index
      %c0_6 = arith.constant 0 : index
      %11 = vector.load %arg3[%c0_4, %c0_5, %c0_6] : memref<1x8x128xf32, #tpu.memory_space<vmem>>, vector<1x8x128xf32>
      %12 = vector.shape_cast %11 : vector<1x8x128xf32> to vector<8x128xf32>
      %c0_7 = arith.constant 0 : index
      %c0_8 = arith.constant 0 : index
      %c0_9 = arith.constant 0 : index
      %13 = vector.load %arg4[%c0_7, %c0_8, %c0_9] : memref<1x8x128xf32, #tpu.memory_space<vmem>>, vector<1x8x128xf32>
      %14 = vector.shape_cast %13 : vector<1x8x128xf32> to vector<8x128xf32>
      %15 = vector.broadcast %9 : f32 to vector<8x128xf32>
      %16 = arith.mulf %15, %12 : vector<8x128xf32>
      %17 = vector.broadcast %10 : f32 to vector<8x128xf32>
      %18 = arith.addf %16, %17 : vector<8x128xf32>
      %cst = arith.constant 1.000000e-01 : f32
      %19 = vector.broadcast %cst : f32 to vector<8x128xf32>
      %20 = arith.maximumf %18, %19 : vector<8x128xf32>
      %cst_10 = arith.constant 1.000000e+00 : f32
      %21 = vector.broadcast %cst_10 : f32 to vector<8x128xf32>
      %22 = arith.divf %21, %20 : vector<8x128xf32>
      %23 = arith.subf %22, %14 : vector<8x128xf32>
      %24 = math.absf %23 : vector<8x128xf32>
      %25 = tpu.iota {dimensions = array<i32: 0>} : vector<8x128xi32>
      %26 = tpu.iota {dimensions = array<i32: 1>} : vector<8x128xi32>
      %c8_i32 = arith.constant 8 : i32
      %27 = arith.muli %arg2, %c8_i32 : i32
      %28 = vector.broadcast %27 : i32 to vector<8x128xi32>
      %29 = arith.addi %28, %25 : vector<8x128xi32>
      %c128_i32 = arith.constant 128 : i32
      %30 = vector.broadcast %c128_i32 : i32 to vector<8x128xi32>
      %31 = arith.muli %29, %30 : vector<8x128xi32>
      %32 = arith.addi %31, %26 : vector<8x128xi32>
      %c256_i32 = arith.constant 256 : i32
      %33 = vector.broadcast %c256_i32 : i32 to vector<8x128xi32>
      %34 = arith.cmpi slt, %32, %33 : vector<8x128xi32>
      %cst_11 = arith.constant 0.000000e+00 : f32
      %35 = vector.broadcast %cst_11 : f32 to vector<8x128xf32>
      %36 = arith.select %34, %24, %35 : vector<8x128xi1>, vector<8x128xf32>
      %c0_12 = arith.constant 0 : index
      %c0_13 = arith.constant 0 : index
      %37 = vector.load %arg7[%c0_12, %c0_13] : memref<8x128xf32, #tpu.memory_space<vmem>>, vector<8x128xf32>
      %38 = vector.shape_cast %36 : vector<8x128xf32> to vector<1x8x128xf32>
      %cst_14 = arith.constant dense<0.000000e+00> : vector<8x128xf32>
      %39 = vector.multi_reduction <add>, %38, %cst_14 [0] : vector<1x8x128xf32> to vector<8x128xf32>
      %40 = arith.addf %37, %39 : vector<8x128xf32>
      %c0_15 = arith.constant 0 : index
      %c0_16 = arith.constant 0 : index
      %41 = vector.load %arg7[%c0_15, %c0_16] : memref<8x128xf32, #tpu.memory_space<vmem>>, vector<8x128xf32>
      tpu.vector_store %arg7[%c0_15, %c0_16], %40 {strides = array<i32>} : memref<8x128xf32, #tpu.memory_space<vmem>>, vector<8x128xf32>,
      %c0_i32_17 = arith.constant 0 : i32
      %42 = arith.cmpi eq, %arg2, %c0_i32_17 : i32
      %43 = arith.extui %42 : i1 to i32
      %c0_i32_18 = arith.constant 0 : i32
      %44 = arith.cmpi ne, %43, %c0_i32_18 : i32
      scf.if %44 {
        %c0_19 = arith.constant 0 : index
        %c0_20 = arith.constant 0 : index
        %45 = vector.load %arg7[%c0_19, %c0_20] : memref<8x128xf32, #tpu.memory_space<vmem>>, vector<8x128xf32>
        %c0_21 = arith.constant 0 : index
        %c0_22 = arith.constant 0 : index
        %c0_23 = arith.constant 0 : index
        %46 = vector.load %arg5[%c0_21, %c0_22, %c0_23] : memref<1x8x128xf32, #tpu.memory_space<vmem>>, vector<1x8x128xf32>
        %47 = vector.shape_cast %46 : vector<1x8x128xf32> to vector<8x128xf32>
        %48 = vector.shape_cast %45 : vector<8x128xf32> to vector<1x8x128xf32>
        tpu.vector_store %arg5[%c0_21, %c0_22, %c0_23], %48 {strides = array<i32>} : memref<1x8x128xf32, #tpu.memory_space<vmem>>, vector<1x8x128xf32>,
      } else {
      }
    } else {
    }
    return
  }
  func.func @transform_0(%arg0: i32, %arg1: i32, %arg2: i32) -> (i32, i32, i32) {
    %c0_i32 = arith.constant 0 : i32
    %c0_i32_0 = arith.constant 0 : i32
    return %arg0, %arg2, %c0_i32 : i32, i32, i32
  }
  func.func @transform_1(%arg0: i32, %arg1: i32, %arg2: i32) -> (i32, i32, i32) {
    %c0_i32 = arith.constant 0 : i32
    %c0_i32_0 = arith.constant 0 : i32
    return %arg0, %arg2, %c0_i32 : i32, i32, i32
  }
  func.func @transform_2(%arg0: i32, %arg1: i32, %arg2: i32) -> (i32, i32, i32) {
    %c0_i32 = arith.constant 0 : i32
    %c0_i32_0 = arith.constant 0 : i32
    %c0_i32_1 = arith.constant 0 : i32
    return %arg0, %c0_i32, %c0_i32_0 : i32, i32, i32
  }
}

</mosaic_0001>

<llo_original>
// kernel: tpu_custom_call.1
$region0: #{tpu_custom_call.1}
  #allocation0 [shape = 'u32[]', space=smem, size = 0x4, offset = 0x4, fixed_abs, tag = 'smem constant byte address 0x4 - core index']
  #allocation1 [shape = 'u32[72,128]{1,0:T(1,128)}', space=vmem, size = 0x9000, scoped, tag = 'internal scratch']
  #allocation2 [shape = 'f32[5,8,128]{2,1,0:T(8,128)}', space=vmem, size = 0x5000, scoped, tag = 'scratch operand']
  #allocation3 [shape = 'f32[8,128]{1,0:T(8,128)}', space=vmem, size = 0x1000, scoped, tag = 'scratch operand']
  #allocation4 [shape = 'f32[2]{0:T(128)}', space=smem, size = 0x200, scoped, tag = 'scratch operand']
  %s0 = inlined_call_operand.hbm [shape: f32[2,8,128], index: 0, kind: input, shape index: {}]
  %s1 = inlined_call_operand.hbm [shape: f32[2,8,128], index: 1, kind: input, shape index: {}]
  %s2 = inlined_call_operand.hbm [shape: f32[2,8,128], index: 2, kind: output, shape index: {}]
  %s3 = sld [smem:[#allocation0]]
  $region69: #{tpu_custom_call.1} parent=0
    _
  %s5 = ssub.s32 1, %s3
  %s6 = scalar_select 0, %s5, %s3
  $region1: #{tpu_custom_call.1} parent=0
    #allocation5 [shape = 'u8[8192]{0}', space=vmem, size = 0x2000, scoped, tag = 'input window, operand 0']
    #allocation6 [shape = 's32[2]{0}', space=sflag, size = 0x8, scoped, tag = 'scoped memory for tpu_custom_call.1']
    #allocation7 [shape = 's32[2]{0}', space=sflag, size = 0x8, scoped, tag = 'scoped memory for tpu_custom_call.1']
    #allocation8 [shape = 'u8[8192]{0}', space=vmem, size = 0x2000, scoped, tag = 'input window, operand 1']
    #allocation9 [shape = 's32[2]{0}', space=sflag, size = 0x8, scoped, tag = 'scoped memory for tpu_custom_call.1']
    #allocation10 [shape = 'u8[8192]{0}', space=vmem, size = 0x2000, scoped, tag = 'output window, operand 0']
    %7 = vsyncpa [#allocation6], 0
    %s8 = scalar_lea.sflag [#allocation6], 1
    %9 = vsyncpa %s8, 0
    %10 = vsyncpa [#allocation9], 0
    %s11 = scalar_lea.sflag [#allocation9], 1
    %12 = vsyncpa %s11, 0
    %13 = vsyncpa [#allocation7], 0
    %s14 = scalar_lea.sflag [#allocation7], 1
    %15 = vsyncpa %s14, 0
    loop: start=0, step=1, limit=6
    $region2: #{tpu_custom_call.1} parent=1 // loop_pre_header
      _
    $region3: #{tpu_custom_call.1} parent=1 // loop_header
      %s17 = sphi 0, %s21
      %p18 = scmp.ge.s32.totalorder %s17, 6
      %s24 = sphi 0, %s43
      %s25 = sphi 0, %s39
      %s26 = sphi 0, %s35
      %s27 = sphi 0, %s24
      %s28 = sphi 0, %s25
      %s29 = sphi 0, %s26
      %s30 = sphi 0, %s27
      %s31 = sphi 0, %s28
      %s32 = sphi 0, %s29
      %s48 = sphi 0, %s50
      %s51 = sphi 0, %s48
      %s52 = sphi 0, %s51
      %s68 = sphi 0, %s52
      %s76 = sphi 0, %s78
      %s79 = sphi 0, %s76
      %s80 = sphi 0, %s79
      %s96 = sphi 0, %s80
      %s102 = sphi 0, %s104
      %s105 = sphi 0, %s102
      %s106 = sphi 0, %s105
      %s122 = sphi 0, %s106
    $region4: #{tpu_custom_call.1} parent=1 // loop_header_branch
      %20 = sbr.rel (%p18) target = $region8
    $region5: #{tpu_custom_call.1} parent=1 // loop_body
      %s22 = ssub.s32 %s17, 1
      %s23 = ssub.s32 %s17, 2
      %s33 = sadd.s32 1, %s26
      %p34 = scmp.ge.s32.totalorder %s33, 1
      %s35 = scalar_select %p34, 0, %s33
      %s36 = sadd.s32 1, %s25
      %s37 = scalar_select %p34, %s36, %s25
      %p38 = scmp.ge.s32.totalorder %s37, 2
      %s39 = scalar_select %p38, 0, %s37
      %s40 = sadd.s32 1, %s24
      %s41 = scalar_select %p38, %s40, %s24
      %p42 = scmp.ge.s32.totalorder %s41, 2
      %s43 = scalar_select %p42, 0, %s41
      %s44 = ssub.s32 %s24, %s43
      %s45 = ssub.s32 %s26, %s35
      %s46 = sor.u32 %s44, %s45
      %p47 = scmp.eq.s32.totalorder %s46, 0
      %s49 = sadd.s32 %s48, 1
      %s50 = scalar_select %p47, %s48, %s49
      %p53 = pneg %p47
      %p54 = scmp.eq.s32.totalorder %s17, 3
      %p55 = por %p53, %p54
      %p56 = scmp.ne.s32.totalorder %s48, %s51
      %p57 = scmp.eq.s32.totalorder %s17, 0
      %p58 = por %p56, %p57
      %p59 = scmp.ne.s32.totalorder %s48, %s51
      %p60 = scmp.eq.s32.totalorder %s22, 3
      %p61 = por %p59, %p60
      %p62 = scmp.ne.s32.totalorder %s51, %s52
      %p63 = scmp.eq.s32.totalorder %s22, 0
      %p64 = por %p62, %p63
      %p65 = scmp.ne.s32.totalorder %s51, %s52
      %p66 = scmp.eq.s32.totalorder %s23, 3
      %p67 = por %p65, %p66
      %p69 = scmp.ne.s32.totalorder %s52, %s68
      %p70 = scmp.eq.s32.totalorder %s23, 0
      %p71 = por %p69, %p70
      %s72 = ssub.s32 %s24, %s43
      %s73 = ssub.s32 %s26, %s35
      %s74 = sor.u32 %s72, %s73
      %p75 = scmp.eq.s32.totalorder %s74, 0
      %s77 = sadd.s32 %s76, 1
      %s78 = scalar_select %p75, %s76, %s77
      %p81 = pneg %p75
      %p82 = scmp.eq.s32.totalorder %s17, 3
      %p83 = por %p81, %p82
      %p84 = scmp.ne.s32.totalorder %s76, %s79
      %p85 = scmp.eq.s32.totalorder %s17, 0
      %p86 = por %p84, %p85
      %p87 = scmp.ne.s32.totalorder %s76, %s79
      %p88 = scmp.eq.s32.totalorder %s22, 3
      %p89 = por %p87, %p88
      %p90 = scmp.ne.s32.totalorder %s79, %s80
      %p91 = scmp.eq.s32.totalorder %s22, 0
      %p92 = por %p90, %p91
      %p93 = scmp.ne.s32.totalorder %s79, %s80
      %p94 = scmp.eq.s32.totalorder %s23, 3
      %p95 = por %p93, %p94
      %p97 = scmp.ne.s32.totalorder %s80, %s96
      %p98 = scmp.eq.s32.totalorder %s23, 0
      %p99 = por %p97, %p98
      %s100 = ssub.s32 %s24, %s43
      %p101 = scmp.eq.s32.totalorder %s100, 0
      %s103 = sadd.s32 %s102, 1
      %s104 = scalar_select %p101, %s102, %s103
      %p107 = pneg %p101
      %p108 = scmp.eq.s32.totalorder %s17, 3
      %p109 = por %p107, %p108
      %p110 = scmp.ne.s32.totalorder %s102, %s105
      %p111 = scmp.eq.s32.totalorder %s17, 0
      %p112 = por %p110, %p111
      %p113 = scmp.ne.s32.totalorder %s102, %s105
      %p114 = scmp.eq.s32.totalorder %s22, 3
      %p115 = por %p113, %p114
      %p116 = scmp.ne.s32.totalorder %s105, %s106
      %p117 = scmp.eq.s32.totalorder %s22, 0
      %p118 = por %p116, %p117
      %p119 = scmp.ne.s32.totalorder %s105, %s106
      %p120 = scmp.eq.s32.totalorder %s23, 3
      %p121 = por %p119, %p120
      %p123 = scmp.ne.s32.totalorder %s106, %s122
      %p124 = scmp.eq.s32.totalorder %s23, 0
      %p125 = por %p123, %p124
      %p126 = scmp.le.s32.totalorder 1, %s17
      %p127 = scmp.lt.s32.totalorder %s17, 5
      %p128 = pnand %p126, %p127
      %p129 = pneg %p128
      // Predicated region
      $region9: #{tpu_custom_call.1} parent=5 // pred_check
        _
      $region10: #{tpu_custom_call.1} parent=5 // pred_check_branch
        %131 = sbr.rel (%p128) target = $region12
      $region11: #{tpu_custom_call.1} parent=5 // pred_region
        %s132 = ssub.s32 %s17, 1
      $region12: #{tpu_custom_call.1} parent=5 // pred_fallthru
        _
      %p133 = scmp.lt.s32.totalorder %s17, 4
      // Predicated region
      $region13: #{tpu_custom_call.1} parent=5 // pred_check
        %p134 = pneg %p133
      $region14: #{tpu_custom_call.1} parent=5 // pred_check_branch
        %136 = sbr.rel (%p134) target = $region16
      $region15: #{tpu_custom_call.1} parent=5 // pred_region
        // Predicated region
        $region17: #{tpu_custom_call.1} parent=15 // pred_check
          %p137 = pneg %p58
        $region18: #{tpu_custom_call.1} parent=15 // pred_check_branch
          %139 = sbr.rel (%p137) target = $region20
        $region19: #{tpu_custom_call.1} parent=15 // pred_region
          %s140 = sand.u32 %s48, 1
          %s141 = scalar_lea.sflag [#allocation6], %s140
          %s142 = sand.u32 %s48, 1
          %s143 = smul.addr %s142, 8
          %s144 = scalar_lea.vmem [#allocation5], %s143
          %146 = vsyncadd %s141, 0
          %s147 = sadd.s32 %s26, %s24
          %s148 = smul.addr %s147, 8
          %s149 = scalar_lea.hbm %s0, %s148
          %s151 = sshll.u32 %s149, 4
          %s152 = int_to_ptr.hbm [resolvable:$true] %s151
          %s153 = sshll.u32 %s144, 4
          %s154 = int_to_ptr.vmem [resolvable:$true] %s153
          %156 = dma.hbm_to_vmem [thread:$0]  %s152, 128, %s154, %s141
        $region20: #{tpu_custom_call.1} parent=15 // pred_fallthru
          _
        // Predicated region
        $region21: #{tpu_custom_call.1} parent=15 // pred_check
          %p157 = pneg %p86
        $region22: #{tpu_custom_call.1} parent=15 // pred_check_branch
          %159 = sbr.rel (%p157) target = $region24
        $region23: #{tpu_custom_call.1} parent=15 // pred_region
          %s160 = sand.u32 %s76, 1
          %s161 = scalar_lea.sflag [#allocation9], %s160
          %s162 = sand.u32 %s76, 1
          %s163 = smul.addr %s162, 8
          %s164 = scalar_lea.vmem [#allocation8], %s163
          %166 = vsyncadd %s161, 0
          %s167 = sadd.s32 %s26, %s24
          %s168 = smul.addr %s167, 8
          %s169 = scalar_lea.hbm %s1, %s168
          %s171 = sshll.u32 %s169, 4
          %s172 = int_to_ptr.hbm [resolvable:$true] %s171
          %s173 = sshll.u32 %s164, 4
          %s174 = int_to_ptr.vmem [resolvable:$true] %s173
          %176 = dma.hbm_to_vmem [thread:$0]  %s172, 128, %s174, %s161
        $region24: #{tpu_custom_call.1} parent=15 // pred_fallthru
          _
      $region16: #{tpu_custom_call.1} parent=5 // pred_fallthru
        _
      %p177 = scmp.le.s32.totalorder 1, %s17
      %p178 = scmp.lt.s32.totalorder %s17, 5
      %p179 = pnand %p177, %p178
      %p180 = pneg %p179
      // Predicated region
      $region25: #{tpu_custom_call.1} parent=5 // pred_check
        _
      $region26: #{tpu_custom_call.1} parent=5 // pred_check_branch
        %182 = sbr.rel (%p179) target = $region28
      $region27: #{tpu_custom_call.1} parent=5 // pred_region
        %s183 = ssub.s32 %s17, 1
        %s184 = sand.u32 %s51, 1
        %s185 = scalar_lea.sflag [#allocation6], %s184
        %s186 = sand.u32 %s51, 1
        %s187 = smul.addr %s186, 8
        %s188 = scalar_lea.vmem [#allocation5], %s187
        // Predicated region
        $region29: #{tpu_custom_call.1} parent=27 // pred_check
          %p189 = pneg %p64
        $region30: #{tpu_custom_call.1} parent=27 // pred_check_branch
          %191 = sbr.rel (%p189) target = $region32
        $region31: #{tpu_custom_call.1} parent=27 // pred_region
          %193 = dma.done %s185, 128
        $region32: #{tpu_custom_call.1} parent=27 // pred_fallthru
          _
        %s194 = sand.u32 %s79, 1
        %s195 = scalar_lea.sflag [#allocation9], %s194
        %s196 = sand.u32 %s79, 1
        %s197 = smul.addr %s196, 8
        %s198 = scalar_lea.vmem [#allocation8], %s197
        // Predicated region
        $region33: #{tpu_custom_call.1} parent=27 // pred_check
          %p199 = pneg %p92
        $region34: #{tpu_custom_call.1} parent=27 // pred_check_branch
          %201 = sbr.rel (%p199) target = $region36
        $region35: #{tpu_custom_call.1} parent=27 // pred_region
          %203 = dma.done %s195, 128
        $region36: #{tpu_custom_call.1} parent=27 // pred_fallthru
          _
        %s204 = sand.u32 %s51, 1
        %s205 = scalar_lea.sflag [#allocation6], %s204
        %s206 = sand.u32 %s51, 1
        %s207 = smul.addr %s206, 8
        %s208 = scalar_lea.vmem [#allocation5], %s207
        %p209 = pneg %p64
        %p210 = pneg %p61
        %s211 = sand.u32 %s79, 1
        %s212 = scalar_lea.sflag [#allocation9], %s211
        %s213 = sand.u32 %s79, 1
        %s214 = smul.addr %s213, 8
        %s215 = scalar_lea.vmem [#allocation8], %s214
        %p216 = pneg %p92
        %p217 = pneg %p89
        %p218 = pneg %p118
        %p219 = pneg %p115
        %s220 = sand.u32 %s105, 1
        %s221 = scalar_lea.sflag [#allocation7], %s220
        %s222 = sand.u32 %s105, 1
        %s223 = smul.addr %s222, 8
        %s224 = scalar_lea.vmem [#allocation10], %s223
        %p225 = scmp.eq.s32.totalorder %s28, 0
        // Predicated region
        $region37: #{tpu_custom_call.1} parent=27 // pred_check
          %p226 = pneg %p225
        $region38: #{tpu_custom_call.1} parent=27 // pred_check_branch
          %228 = sbr.rel (%p226) target = $region40
        $region39: #{tpu_custom_call.1} parent=27 // pred_region
          %p229 = scmp.eq.s32.totalorder %s29, 0
          // Predicated region
          $region41: #{tpu_custom_call.1} parent=39 // pred_check
            %p230 = pneg %p229
          $region42: #{tpu_custom_call.1} parent=39 // pred_check_branch
            %232 = sbr.rel (%p230) target = $region44
          $region43: #{tpu_custom_call.1} parent=39 // pred_region
            %233 = vst [vmem:[#allocation2] sm:$0xff] 0.0
            %234 = vst [vmem:[#allocation2 + $0x8] sm:$0xff] 0.0
            %235 = vst [vmem:[#allocation2 + $0x10] sm:$0xff] 0.0
            %236 = vst [vmem:[#allocation2 + $0x18] sm:$0xff] 0.0
            %237 = vst [vmem:[#allocation2 + $0x20] sm:$0xff] 0.0
          $region44: #{tpu_custom_call.1} parent=39 // pred_fallthru
            _
          %v238 = vld [vmem:[%s188] sm:$0xff]
          %v239 = vld [vmem:[%s198] sm:$0xff]
          %vm240 = vcmp.gt.f32.partialorder %v239, 0.0
          %v241 = vsel %vm240, 1, 0
          %v242 = vcvt.s32.f32 %v241
          %v243 = vsel %vm240, %v239, 1.0
          %v244 = vrcp.pop %v243
          %v245 = vmul.f32 %v243, %v244
          %v246 = vsub.f32 1.0, %v245
          %v247 = vmul.f32 %v244, %v246
          %v248 = vadd.f32 %v244, %v247
          %vm249 = vweird.f32 %v243
          %vm250 = vweird.f32 %v244
          %vm251 = vmor %vm249, %vm250
          %v252 = vsel %vm251, %v244, %v248
          %v253 = vand.u32 2147483647, %v243
          %vm254 = vcmp.eq.f32.partialorder %v253, 8.507059e+37
          %v255 = vand.u32 %v243, 2147483648
          %v256 = vor.u32 1.1754944e-38, %v255
          %v257 = vsel %vm254, %v256, %v252
          %v258 = vmul.f32 %v242, %v257
          %v259 = vsel %vm240, %v238, 0.0
          %v260 = vld [vmem:[#allocation2] sm:$0xff]
          %v261 = vmul.f32 %v259, %v238
          %v262 = vadd.f32 %v261, 0.0
          %v263 = vadd.f32 %v260, %v262
          %264 = vst [vmem:[#allocation2] sm:$0xff] %v263
          %s265 = scalar_lea.vmem [#allocation2], 8
          %v266 = vld [vmem:[%s265] sm:$0xff]
          %v267 = vadd.f32 %v259, 0.0
          %v268 = vadd.f32 %v266, %v267
          %269 = vst [vmem:[%s265] sm:$0xff] %v268
          %s270 = scalar_lea.vmem [#allocation2], 16
          %v271 = vld [vmem:[%s270] sm:$0xff]
          %v272 = vadd.f32 %v242, 0.0
          %v273 = vadd.f32 %v271, %v272
          %274 = vst [vmem:[%s270] sm:$0xff] %v273
          %s275 = scalar_lea.vmem [#allocation2], 24
          %v276 = vld [vmem:[%s275] sm:$0xff]
          %v277 = vmul.f32 %v259, %v258
          %v278 = vadd.f32 %v277, 0.0
          %v279 = vadd.f32 %v276, %v278
          %280 = vst [vmem:[%s275] sm:$0xff] %v279
          %s281 = scalar_lea.vmem [#allocation2], 32
          %v282 = vld [vmem:[%s281] sm:$0xff]
          %v283 = vadd.f32 %v258, 0.0
          %v284 = vadd.f32 %v282, %v283
          %285 = vst [vmem:[%s281] sm:$0xff] %v284
        $region40: #{tpu_custom_call.1} parent=27 // pred_fallthru
          _
        %p286 = scmp.eq.s32.totalorder %s28, 1
        // Predicated region
        $region45: #{tpu_custom_call.1} parent=27 // pred_check
          %p287 = pneg %p286
        $region46: #{tpu_custom_call.1} parent=27 // pred_check_branch
          %289 = sbr.rel (%p287) target = $region48
        $region47: #{tpu_custom_call.1} parent=27 // pred_region
          %p290 = scmp.eq.s32.totalorder %s29, 0
          // Predicated region
          $region49: #{tpu_custom_call.1} parent=47 // pred_check
            %p291 = pneg %p290
          $region50: #{tpu_custom_call.1} parent=47 // pred_check_branch
            %293 = sbr.rel (%p291) target = $region52
          $region51: #{tpu_custom_call.1} parent=47 // pred_region
            %v294 = vld [vmem:[#allocation2] sm:$0xff]
            %295 = vadd.xlane.f32.xlu0 %v294
            %v296 = vpop.xlane.xlu0 %295
            %v297 = vrot.slane %v296, 4
            %v298 = vadd.f32 %v296, %v297
            %v299 = vrot.slane %v298, 2
            %v300 = vadd.f32 %v298, %v299
            %v301 = vrot.slane %v300, 1
            %v302 = vadd.f32 %v300, %v301
            %s303 = vtos %v302
            %s304 = scalar_lea.vmem [#allocation2], 8
            %v305 = vld [vmem:[%s304] sm:$0xff]
            %306 = vadd.xlane.f32.xlu0 %v305
            %v307 = vpop.xlane.xlu0 %306
            %v308 = vrot.slane %v307, 4
            %v309 = vadd.f32 %v307, %v308
            %v310 = vrot.slane %v309, 2
            %v311 = vadd.f32 %v309, %v310
            %v312 = vrot.slane %v311, 1
            %v313 = vadd.f32 %v311, %v312
            %s314 = vtos %v313
            %s315 = scalar_lea.vmem [#allocation2], 16
            %v316 = vld [vmem:[%s315] sm:$0xff]
            %317 = vadd.xlane.f32.xlu0 %v316
            %v318 = vpop.xlane.xlu0 %317
            %v319 = vrot.slane %v318, 4
            %v320 = vadd.f32 %v318, %v319
            %v321 = vrot.slane %v320, 2
            %v322 = vadd.f32 %v320, %v321
            %v323 = vrot.slane %v322, 1
            %v324 = vadd.f32 %v322, %v323
            %s325 = vtos %v324
            %s326 = scalar_lea.vmem [#allocation2], 24
            %v327 = vld [vmem:[%s326] sm:$0xff]
            %328 = vadd.xlane.f32.xlu0 %v327
            %v329 = vpop.xlane.xlu0 %328
            %v330 = vrot.slane %v329, 4
            %v331 = vadd.f32 %v329, %v330
            %v332 = vrot.slane %v331, 2
            %v333 = vadd.f32 %v331, %v332
            %v334 = vrot.slane %v333, 1
            %v335 = vadd.f32 %v333, %v334
            %s336 = vtos %v335
            %s337 = scalar_lea.vmem [#allocation2], 32
            %v338 = vld [vmem:[%s337] sm:$0xff]
            %339 = vadd.xlane.f32.xlu0 %v338
            %v340 = vpop.xlane.xlu0 %339
            %v341 = vrot.slane %v340, 4
            %v342 = vadd.f32 %v340, %v341
            %v343 = vrot.slane %v342, 2
            %v344 = vadd.f32 %v342, %v343
            %v345 = vrot.slane %v344, 1
            %v346 = vadd.f32 %v344, %v345
            %s347 = vtos %v346
            %s348 = smul.f32 %s303, %s325
            %s349 = smul.f32 %s314, %s314
            %s350 = ssub.f32 %s348, %s349
            %p351 = scmp.ne.f32.partialorder %s350, 0.0
            %s352 = scalar_select %p351, %s350, 1.0
            %s353 = smul.f32 %s325, %s336
            %s354 = smul.f32 %s314, %s347
            %s355 = ssub.f32 %s353, %s354
            %v356 = vstv %s352
            %v357 = vrcp.pop %v356
            %v358 = vmul.f32 %v356, %v357
            %v359 = vsub.f32 1.0, %v358
            %v360 = vmul.f32 %v357, %v359
            %v361 = vadd.f32 %v357, %v360
            %vm362 = vweird.f32 %v356
            %vm363 = vweird.f32 %v357
            %vm364 = vmor %vm362, %vm363
            %v365 = vsel %vm364, %v357, %v361
            %v366 = vand.u32 2147483647, %v356
            %vm367 = vcmp.eq.f32.partialorder %v366, 8.507059e+37
            %v368 = vand.u32 %v356, 2147483648
            %v369 = vor.u32 1.1754944e-38, %v368
            %v370 = vsel %vm367, %v369, %v365
            %s371 = vtos %v370
            %s372 = smul.f32 %s355, %s371
            %s373 = scalar_select %p351, %s372, 0.0
            %s374 = scalar_lea.smem [#allocation4], 0
            %375 = sst [smem:[%s374]] %s373
            %s376 = smul.f32 %s303, %s347
            %s377 = smul.f32 %s314, %s336
            %s378 = ssub.f32 %s376, %s377
            %v379 = vstv %s352
            %v380 = vrcp.pop %v379
            %v381 = vmul.f32 %v379, %v380
            %v382 = vsub.f32 1.0, %v381
            %v383 = vmul.f32 %v380, %v382
            %v384 = vadd.f32 %v380, %v383
            %vm385 = vweird.f32 %v379
            %vm386 = vweird.f32 %v380
            %vm387 = vmor %vm385, %vm386
            %v388 = vsel %vm387, %v380, %v384
            %v389 = vand.u32 2147483647, %v379
            %vm390 = vcmp.eq.f32.partialorder %v389, 8.507059e+37
            %v391 = vand.u32 %v379, 2147483648
            %v392 = vor.u32 1.1754944e-38, %v391
            %v393 = vsel %vm390, %v392, %v388
            %s394 = vtos %v393
            %s395 = smul.f32 %s378, %s394
            %s396 = scalar_select %p351, %s395, 0.0
            %s397 = scalar_lea.smem [#allocation4], 1
            %398 = sst [smem:[%s397]] %s396
            %399 = vst [vmem:[#allocation3] sm:$0xff] 0.0
          $region52: #{tpu_custom_call.1} parent=47 // pred_fallthru
            _
          %s400 = sld [smem:[#allocation4]]
          %s401 = sld [smem:[#allocation4 + $0x1]]
          %v402 = vld [vmem:[%s188] sm:$0xff]
          %v403 = vld [vmem:[%s198] sm:$0xff]
          %v404 = vstv %s400
          %v405 = vmul.f32 %v404, %v402
          %v406 = vstv %s401
          %v407 = vadd.f32 %v405, %v406
          %v408 = vmax.f32 %v407, 0.1
          %v409 = vrcp.pop %v408
          %v410 = vmul.f32 %v408, %v409
          %v411 = vsub.f32 1.0, %v410
          %v412 = vmul.f32 %v409, %v411
          %v413 = vadd.f32 %v409, %v412
          %vm414 = vweird.f32 %v408
          %vm415 = vweird.f32 %v409
          %vm416 = vmor %vm414, %vm415
          %v417 = vsel %vm416, %v409, %v413
          %v418 = vand.u32 2147483647, %v408
          %vm419 = vcmp.eq.f32.partialorder %v418, 8.507059e+37
          %v420 = vand.u32 %v408, 2147483648
          %v421 = vor.u32 1.1754944e-38, %v420
          %v422 = vsel %vm419, %v421, %v417
          %v423 = vmul.f32 1.0, %v422
          %v424 = vsub.f32 %v423, %v403
          %v425 = vand.u32 2147483647, %v424
          %v426 = vlaneseq
          %v427 = vshrl.u32 %v426, 7
          %v428 = vlaneseq
          %v429 = vand.u32 %v428, 127
          %s430 = smul.u32 %s29, 8
          %v431 = vstv %s430
          %v432 = vadd.s32 %v431, %v427
          %v433 = vmul.u32 %v432, 128
          %v434 = vadd.s32 %v433, %v429
          %vm435 = vcmp.lt.s32.totalorder %v434, 256
          %v436 = vsel %vm435, %v425, 0.0
          %v437 = vld [vmem:[#allocation3] sm:$0xff]
          %v438 = vadd.f32 %v436, 0.0
          %v439 = vadd.f32 %v437, %v438
          %440 = vst [vmem:[#allocation3] sm:$0xff] %v439
          // Predicated region
          $region53: #{tpu_custom_call.1} parent=47 // pred_check
            %p441 = pneg %p290
          $region54: #{tpu_custom_call.1} parent=47 // pred_check_branch
            %443 = sbr.rel (%p441) target = $region56
          $region55: #{tpu_custom_call.1} parent=47 // pred_region
            %v444 = vld [vmem:[#allocation3] sm:$0xff]
            %445 = vst [vmem:[%s224] sm:$0xff] %v444
          $region56: #{tpu_custom_call.1} parent=47 // pred_fallthru
            _
        $region48: #{tpu_custom_call.1} parent=27 // pred_fallthru
          _
        %s446 = sand.u32 %s105, 1
        %s447 = scalar_lea.sflag [#allocation7], %s446
        %s448 = sand.u32 %s105, 1
        %s449 = smul.addr %s448, 8
        %s450 = scalar_lea.vmem [#allocation10], %s449
        // Predicated region
        $region57: #{tpu_custom_call.1} parent=27 // pred_check
          %p451 = pneg %p115
        $region58: #{tpu_custom_call.1} parent=27 // pred_check_branch
          %453 = sbr.rel (%p451) target = $region60
        $region59: #{tpu_custom_call.1} parent=27 // pred_region
          %455 = vsyncadd %s447, 0
          %s456 = smul.addr %s27, 8
          %s457 = scalar_lea.hbm %s2, %s456
          %s459 = sshll.u32 %s450, 4
          %s460 = int_to_ptr.vmem [resolvable:$true] %s459
          %s461 = sshll.u32 %s457, 4
          %s462 = int_to_ptr.hbm [resolvable:$true] %s461
          %464 = dma.vmem_to_hbm [thread:$0]  %s460, 128, %s462, %s447
        $region60: #{tpu_custom_call.1} parent=27 // pred_fallthru
          _
      $region28: #{tpu_custom_call.1} parent=5 // pred_fallthru
        _
      %p465 = scmp.le.s32.totalorder 2, %s17
      // Predicated region
      $region61: #{tpu_custom_call.1} parent=5 // pred_check
        %p466 = pneg %p465
      $region62: #{tpu_custom_call.1} parent=5 // pred_check_branch
        %468 = sbr.rel (%p466) target = $region64
      $region63: #{tpu_custom_call.1} parent=5 // pred_region
        %s469 = ssub.s32 %s17, 2
        // Predicated region
        $region65: #{tpu_custom_call.1} parent=63 // pred_check
          %p470 = pneg %p121
        $region66: #{tpu_custom_call.1} parent=63 // pred_check_branch
          %472 = sbr.rel (%p470) target = $region68
        $region67: #{tpu_custom_call.1} parent=63 // pred_region
          %s473 = sand.u32 %s106, 1
          %s474 = scalar_lea.sflag [#allocation7], %s473
          %s475 = sand.u32 %s106, 1
          %s476 = smul.addr %s475, 8
          %s477 = scalar_lea.vmem [#allocation10], %s476
          %479 = dma.done %s474, 128
        $region68: #{tpu_custom_call.1} parent=63 // pred_fallthru
          _
      $region64: #{tpu_custom_call.1} parent=5 // pred_fallthru
        _
    $region6: #{tpu_custom_call.1} parent=1 // loop_footer
      %s21 = sadd.s32 1, %s17
    $region7: #{tpu_custom_call.1} parent=1 // loop_footer_branch
      %16 = sbr.rel target = $region3
    $region8: #{tpu_custom_call.1} parent=1 // loop_exit
      _
    %480 = vsyncpa [#allocation6], 1
    %s481 = scalar_lea.sflag [#allocation6], 1
    %482 = vsyncpa %s481, 1
    %483 = vsyncpa [#allocation9], 1
    %s484 = scalar_lea.sflag [#allocation9], 1
    %485 = vsyncpa %s484, 1
    %486 = vsyncpa [#allocation7], 1
    %s487 = scalar_lea.sflag [#allocation7], 1
    %488 = vsyncpa %s487, 1

</llo_original>
